<compile_context>
chip_gen: v7x
topology: tpu7x:2x2x1
jax: 0.10.0
libtpu: 0.0.40
codegen_flags: <defaults>
</compile_context>

<pallas_src>
import jax
import jax.numpy as jnp
from jax import lax
from jax.experimental import pallas as pl
from jax.experimental.pallas import tpu as pltpu


# ----------------------------------------------------------------------------
# pltpu.roll direction probe (one-time, tiny).  We need "lane c -> lane c+20k".
# ----------------------------------------------------------------------------
def _roll_probe_kernel(x_ref, o_ref):
    o_ref[...] = pltpu.roll(x_ref[...], 20, axis=1)


def detect_roll_forward():
    x = jnp.zeros((8, 128), jnp.float32).at[0, 0].set(1.0)
    y = pl.pallas_call(
        _roll_probe_kernel,
        out_shape=jax.ShapeDtypeStruct((8, 128), jnp.float32),
    )(x)
    return bool(y[0, 20] == 1.0)


# ----------------------------------------------------------------------------
# Fused kernel: BT images per grid step, everything in VMEM.
# Per-image layouts (rows are height-major spatial positions, lanes are chans):
#   conv1 out : (768, 128)  row = oh*32 + ow      (oh<24, valid ow<24)
#   pool1     : (208, 128)  row = ph*16 + pw      (ph<12, valid pw<12, +guard)
#   conv2 out : (128, 128)  row = oh2*16 + ow2    (valid oh2,ow2 < 8)
#   pool2     : (32, 128)   row = ph2*8 + pw2     (valid ph2,pw2 < 4)
# ----------------------------------------------------------------------------
def _make_kernel(bt, shifts):
    f32 = jnp.float32
    bf16 = jnp.bfloat16
    n_chunk = bt // 2          # conv2/pool2 processed 2 images at a time (M=256)

    def kernel(p1_ref, w1_ref, b1_ref, w2_ref, b2_ref,
               wf1_ref, bf1_ref, wf2_ref, bf2_ref,
               out_ref, s1, s2, s3, s4):
        # ---- conv1 + relu + 2x2 maxpool, one image at a time ---------------
        for b in range(bt):
            for h in range(2):                       # 384-row chunks: low vreg pressure
                lhs = p1_ref[b, pl.ds(h * 384, 384), :]                  # (384, 25) bf16
                c1 = jnp.dot(lhs, w1_ref[...], preferred_element_type=f32)
                s1[pl.ds(h * 384, 384), :] = jnp.maximum(c1 + b1_ref[...], 0.0)
            # 24x24 -> 12x12, stored at row stride 16 (+ zero guard rows)
            hmax = jnp.maximum(s1[pl.ds(0, 384, stride=2), :],
                               s1[pl.ds(1, 384, stride=2), :])           # row = oh*16 + pw
            pool1 = jnp.max(hmax.reshape(12, 2, 16, 128), axis=1)        # (12, 16, 128)
            s2[b, pl.ds(0, 192), :] = pool1.reshape(192, 128)
            # guard rows, re-zeroed EVERY step (safe under "parallel" sharding)
            s2[b, pl.ds(192, 16), :] = jnp.zeros((16, 128), f32)

        # ---- conv2 + relu (tap-packed) + 2x2 maxpool, 2 images per chunk ---
        for c in range(n_chunk):
            acc = jnp.zeros((256, 128), f32)
            for ki in range(5):                       # 5 packed matmuls instead of 25
                lhs = None
                for kj in range(5):
                    x = s2[pl.ds(2 * c, 2), pl.ds(ki * 16 + kj, 128), :]
                    x = x.reshape(256, 128).astype(bf16)
                    if shifts[kj]:
                        x = pltpu.roll(x, shifts[kj], axis=1)   # ch c -> lane 20*kj + c
                    lhs = x if lhs is None else lhs + x          # disjoint lane bands
                acc = acc + jnp.dot(lhs, w2_ref[ki], preferred_element_type=f32)
            s3[pl.ds(c * 256, 256), :] = jnp.maximum(acc + b2_ref[...], 0.0)

            # 8x8 -> 4x4 for these two images
            hp = jnp.maximum(s3[pl.ds(c * 256, 128, stride=2), :],
                             s3[pl.ds(c * 256 + 1, 128, stride=2), :])   # row = b'*64+oh2*8+pw2
            p2 = jnp.max(hp.reshape(8, 2, 8, 128), axis=1)               # (b'*4+ph2, pw2, ch)
            s4[pl.ds(c * 64, 64), :] = p2.reshape(64, 128)               # row = b*32+ph2*8+pw2

        # ---- fc1 + relu: 16 batched (bt,128) x (128,512) matmuls ------------
        f1 = jnp.zeros((bt, 512), f32)
        for ph in range(4):
            for pw in range(4):
                lhs = s4[pl.ds(ph * 8 + pw, bt, stride=32), :].astype(bf16)  # (bt, 128)
                f1 = f1 + jnp.dot(lhs, wf1_ref[ph * 4 + pw],
                                  preferred_element_type=f32)
        h1 = jnp.maximum(f1 + bf1_ref[...], 0.0)                         # (bt, 512)

        # ---- fc2 + log_softmax (masked to the 10 real classes) --------------
        logits = jnp.dot(h1.astype(bf16), wf2_ref[...],
                         preferred_element_type=f32) + bf2_ref[...]      # (bt, 128)
        lane = lax.broadcasted_iota(jnp.int32, (bt, 128), 1)
        valid = lane < 10
        masked = jnp.where(valid, logits, -1e30)
        m = jnp.max(masked, axis=-1, keepdims=True)
        e = jnp.where(valid, jnp.exp(masked - m), 0.0)
        lse = jnp.log(jnp.sum(e, axis=-1, keepdims=True))
        out_ref[...] = masked - m - lse

    return kernel


# ----------------------------------------------------------------------------
# Wrapper-side glue (one-time weight packing + tiny per-call patch build)
# ----------------------------------------------------------------------------
def _conv1_patches(x_nchw):
    """(B,1,28,28) -> (B, 768, 25) bf16, row index = oh*32 + ow (width padded)."""
    B = x_nchw.shape[0]
    xpad = jnp.pad(x_nchw[:, 0], ((0, 0), (0, 0), (0, 8)))          # (B, 28, 36)
    taps = [xpad[:, ki:ki + 24, kj:kj + 32]
            for ki in range(5) for kj in range(5)]
    p = jnp.stack(taps, axis=-1)                                    # (B, 24, 32, 25)
    return p.reshape(B, 24 * 32, 25).astype(jnp.bfloat16)


def pack_params(params):
    """One-time packing: pad channels to 128 lanes, pre-permute FC, pack conv2 taps."""
    w1, b1, w2, b2, wf1, bf1, wf2, bf2 = params
    bf16, f32 = jnp.bfloat16, jnp.float32
    # conv1: (20,1,5,5) -> (25, 128)   [tap = ki*5+kj]
    w1m = jnp.pad(w1.reshape(20, 25).T, ((0, 0), (0, 108))).astype(bf16)
    b1p = jnp.pad(b1, (0, 108)).reshape(1, 128).astype(f32)
    # conv2, tap-packed: group g = ki, rows = 20*kj + in_ch, cols = out_ch
    w2t = jnp.transpose(w2, (2, 3, 1, 0))                           # (ki, kj, in, out)
    w2t = jnp.pad(w2t, ((0, 0), (0, 0), (0, 0), (0, 78)))           # out -> 128
    w2g = jnp.pad(w2t.reshape(5, 100, 128),
                  ((0, 0), (0, 28), (0, 0))).astype(bf16)           # (5, 128, 128)
    b2p = jnp.pad(b2, (0, 78)).reshape(1, 128).astype(f32)
    # fc1: torch (500, 800), flatten order (c, ph, pw) -> 16 slabs indexed by ph*4+pw
    wf1t = wf1.T.reshape(50, 4, 4, 500)                             # (c, ph, pw, n)
    wf1t = jnp.transpose(wf1t, (1, 2, 0, 3)).reshape(16, 50, 500)
    wf1p = jnp.pad(wf1t, ((0, 0), (0, 78), (0, 12))).astype(bf16)   # (16, 128, 512)
    bf1p = jnp.pad(bf1, (0, 12)).reshape(1, 512).astype(f32)
    # fc2: torch (10,500) -> (512, 128)
    wf2p = jnp.pad(wf2.T, ((0, 12), (0, 118))).astype(bf16)
    bf2p = jnp.pad(bf2, (0, 118)).reshape(1, 128).astype(f32)
    return (w1m, b1p, w2g, b2p, wf1p, bf1p, wf2p, bf2p)


def make_net_forward(bt=8, roll_forward=True):
    assert bt % 2 == 0
    # shifts[kj] must move lane c -> lane c + 20*kj under pltpu.roll
    shifts = tuple((20 * kj) % 128 if roll_forward else (-20 * kj) % 128
                   for kj in range(5))
    kernel = _make_kernel(bt, shifts)

    def forward(x_nchw, packed):
        w1m, b1p, w2g, b2p, wf1p, bf1p, wf2p, bf2p = packed
        patches = _conv1_patches(x_nchw)                            # (B, 768, 25) bf16
        B = patches.shape[0]
        Bp = ((B + bt - 1) // bt) * bt
        if Bp != B:
            patches = jnp.pad(patches, ((0, Bp - B), (0, 0), (0, 0)))

        out = pl.pallas_call(
            kernel,
            out_shape=jax.ShapeDtypeStruct((Bp, 128), jnp.float32),
            grid=(Bp // bt,),
            in_specs=[
                pl.BlockSpec((bt, 768, 25), lambda i: (i, 0, 0)),   # conv1 patches
                pl.BlockSpec((25, 128), lambda i: (0, 0)),          # W1
                pl.BlockSpec((1, 128), lambda i: (0, 0)),           # b1
                pl.BlockSpec((5, 128, 128), lambda i: (0, 0, 0)),   # W2 (packed groups)
                pl.BlockSpec((1, 128), lambda i: (0, 0)),           # b2
                pl.BlockSpec((16, 128, 512), lambda i: (0, 0, 0)),  # W_fc1 (per position)
                pl.BlockSpec((1, 512), lambda i: (0, 0)),           # b_fc1
                pl.BlockSpec((512, 128), lambda i: (0, 0)),         # W_fc2
                pl.BlockSpec((1, 128), lambda i: (0, 0)),           # b_fc2
            ],
            out_specs=pl.BlockSpec((bt, 128), lambda i: (i, 0)),
            scratch_shapes=[
                pltpu.VMEM((768, 128), jnp.float32),        # conv1 output (one image)
                pltpu.VMEM((bt, 208, 128), jnp.float32),    # pool1 (+ zero guard rows)
                pltpu.VMEM((bt * 128, 128), jnp.float32),   # conv2 output
                pltpu.VMEM((bt * 32, 128), jnp.float32),    # pool2
            ],
            compiler_params=pltpu.CompilerParams(
                dimension_semantics=("parallel",),
                vmem_limit_bytes=32 * 1024 * 1024),
        )(patches, w1m, b1p, w2g, b2p, wf1p, bf1p, wf2p, bf2p)
        return out[:B, :10]

    return jax.jit(forward)


# ----------------------------------------------------------------------------
# Pure-JAX reference (torch semantics) and parameter init
# ----------------------------------------------------------------------------
def reference_forward(x, params):
    w1, b1, w2, b2, wf1, bf1, wf2, bf2 = params

    def pool(a):
        return lax.reduce_window(a, -jnp.inf, lax.max,
                                 (1, 1, 2, 2), (1, 1, 2, 2), 'VALID')

    a = lax.conv(x, w1, (1, 1), 'VALID') + b1[None, :, None, None]
    a = pool(jnp.maximum(a, 0.0))
    a = lax.conv(a, w2, (1, 1), 'VALID') + b2[None, :, None, None]
    a = pool(jnp.maximum(a, 0.0))
    a = a.reshape(a.shape[0], 4 * 4 * 50)
    a = jnp.maximum(a @ wf1.T + bf1, 0.0)
    a = a @ wf2.T + bf2
    return jax.nn.log_softmax(a, axis=-1)


def init_params(key):
    ks = jax.random.split(key, 8)

    def init(k, shape, fan_in):
        return jax.random.normal(k, shape, jnp.float32) / jnp.sqrt(fan_in)

    w1 = init(ks[0], (20, 1, 5, 5), 25)
    b1 = init(ks[1], (20,), 25)
    w2 = init(ks[2], (50, 20, 5, 5), 500)
    b2 = init(ks[3], (50,), 500)
    wf1 = init(ks[4], (500, 800), 800)
    bf1 = init(ks[5], (500,), 800)
    wf2 = init(ks[6], (10, 500), 500)
    bf2 = init(ks[7], (10,), 500)
    return (w1, b1, w2, b2, wf1, bf1, wf2, bf2)


if __name__ == "__main__":
    key = jax.random.PRNGKey(0)
    k_x, k_p = jax.random.split(key)

    # MNIST-shaped input (the 4*4*50 flatten requires 1x28x28), small batch.
    x = jax.random.normal(k_x, (2, 1, 28, 28), jnp.float32)
    params = init_params(k_p)
    packed = pack_params(params)              # one-time packing, not in the hot path

    roll_fwd = detect_roll_forward()          # one-time pltpu.roll direction probe
    net_forward = make_net_forward(bt=8, roll_forward=roll_fwd)

    out = jax.block_until_ready(net_forward(x, packed))

    assert out.shape == (2, 10)
    assert bool(jnp.all(jnp.isfinite(out)))
    row_sums = jnp.sum(jnp.exp(out), axis=1)
    assert bool(jnp.all(jnp.abs(row_sums - 1.0) < 1e-4))

    ref = jax.jit(reference_forward)(x, params)
    max_err = float(jnp.max(jnp.abs(out - ref)))
    assert max_err < 0.3, f"mismatch vs reference: {max_err}"

    print("KERNEL_OK")
</pallas_src>

<mosaic_0001>
module attributes {stable_mosaic.version = 11 : i64} {
  func.func @_roll_probe_kernel(%arg0: memref<8x128xf32, #tpu.memory_space<vmem>>, %arg1: memref<8x128xf32, #tpu.memory_space<vmem>>) attributes {dimension_semantics = [], scalar_prefetch = 0 : i64, scratch_operands = 0 : i64, tpu.core_type = #tpu.core_type<tc>} {
    %c0 = arith.constant 0 : index
    %c0_0 = arith.constant 0 : index
    %0 = vector.load %arg0[%c0, %c0_0] : memref<8x128xf32, #tpu.memory_space<vmem>>, vector<8x128xf32>
    %c20_i32 = arith.constant 20 : i32
    %1 = tpu.dynamic_rotate %0 by %c20_i32 dim 1 : vector<8x128xf32>, i32 -> vector<8x128xf32>
    %c0_1 = arith.constant 0 : index
    %c0_2 = arith.constant 0 : index
    %2 = vector.load %arg1[%c0_1, %c0_2] : memref<8x128xf32, #tpu.memory_space<vmem>>, vector<8x128xf32>
    tpu.vector_store %arg1[%c0_1, %c0_2], %1 {strides = array<i32>} : memref<8x128xf32, #tpu.memory_space<vmem>>, vector<8x128xf32>,
    return
  }
}

</mosaic_0001>

<llo_original>
// kernel: tpu_custom_call.1
$region0: #{tpu_custom_call.1}
  #allocation0 [shape = 'u32[]', space=smem, size = 0x4, offset = 0x4, fixed_abs, tag = 'smem constant byte address 0x4 - core index']
  #allocation1 [shape = 'u32[144,128]{1,0:T(1,128)}', space=vmem, size = 0x12000, scoped, tag = 'internal scratch']
  %s0 = inlined_call_operand.hbm [shape: f32[8,128], index: 0, kind: input, shape index: {}]
  %s1 = inlined_call_operand.hbm [shape: f32[8,128], index: 1, kind: output, shape index: {}]
  %s2 = sld [smem:[#allocation0]]
  $region18: #{tpu_custom_call.1} parent=0
    _
  %s4 = ssub.s32 1, %s2
  %s5 = scalar_select 0, %s4, %s2
  $region1: #{tpu_custom_call.1} parent=0
    #allocation2 [shape = 'u8[4096]{0}', space=vmem, size = 0x1000, scoped, tag = 'input window, operand 0, single buffered']
    #allocation3 [shape = 's32[1]{0}', space=sflag, size = 0x4, scoped, tag = 'scoped memory for tpu_custom_call.1']
    #allocation4 [shape = 's32[1]{0}', space=sflag, size = 0x4, scoped, tag = 'scoped memory for tpu_custom_call.1']
    #allocation5 [shape = 'u8[4096]{0}', space=vmem, size = 0x1000, scoped, tag = 'output window, operand 0, single buffered']
    %6 = vsyncpa [#allocation3], 0
    %7 = vsyncpa [#allocation4], 0
    // Predicated region
    $region2: #{tpu_custom_call.1} parent=1 // pred_check
      _
    $region3: #{tpu_custom_call.1} parent=1 // pred_check_branch
      %9 = sbr.rel (0) target = $region5
    $region4: #{tpu_custom_call.1} parent=1 // pred_region
      %s11 = ssub.s32 128, 128
      %12 = vsyncadd [#allocation3], %s11
      %s14 = sshll.u32 [#allocation2], 4
      %s15 = int_to_ptr.vmem [resolvable:$true] %s14
      %17 = dma.hbm_to_vmem [thread:$0]  %s0, 128, %s15, [#allocation3]
    $region5: #{tpu_custom_call.1} parent=1 // pred_fallthru
      _
    // Predicated region
    $region6: #{tpu_custom_call.1} parent=1 // pred_check
      _
    $region7: #{tpu_custom_call.1} parent=1 // pred_check_branch
      %19 = sbr.rel (0) target = $region9
    $region8: #{tpu_custom_call.1} parent=1 // pred_region
      %20 = dma.done [#allocation3], 128
    $region9: #{tpu_custom_call.1} parent=1 // pred_fallthru
      _
    %v21 = vld [vmem:[#allocation2] sm:$0xff]
    %22 = vrot.lane.b32.xlu0 %v21, 20
    %v23 = vpop.permute.xlu0 %22
    %24 = vst [vmem:[#allocation5] sm:$0xff] %v23
    // Predicated region
    $region10: #{tpu_custom_call.1} parent=1 // pred_check
      _
    $region11: #{tpu_custom_call.1} parent=1 // pred_check_branch
      %26 = sbr.rel (0) target = $region13
    $region12: #{tpu_custom_call.1} parent=1 // pred_region
      %s28 = ssub.s32 128, 128
      %29 = vsyncadd [#allocation4], %s28
      %s31 = sshll.u32 [#allocation5], 4
      %s32 = int_to_ptr.vmem [resolvable:$true] %s31
      %34 = dma.vmem_to_hbm [thread:$0]  %s32, 128, %s1, [#allocation4]
    $region13: #{tpu_custom_call.1} parent=1 // pred_fallthru
      _
    // Predicated region
    $region14: #{tpu_custom_call.1} parent=1 // pred_check
      _
    $region15: #{tpu_custom_call.1} parent=1 // pred_check_branch
      %36 = sbr.rel (0) target = $region17
    $region16: #{tpu_custom_call.1} parent=1 // pred_region
      %37 = dma.done [#allocation4], 128
    $region17: #{tpu_custom_call.1} parent=1 // pred_fallthru
      _
    %38 = vsyncpa [#allocation3], 1
    %39 = vsyncpa [#allocation4], 1

</llo_original>
